<compile_context>
chip_gen: v5e
topology: v5e:2x2
jax: 0.10.0
libtpu: 0.0.40
codegen_flags: <defaults>
</compile_context>

<pallas_src>
import jax
import jax.numpy as jnp
from jax.experimental import pallas as pl
from jax.experimental.pallas import tpu as pltpu

_LANES = 128


def _sign_kernel(x_ref, o_ref):
    x = x_ref[...]
    one = jnp.ones((), dtype=o_ref.dtype)
    o_ref[...] = jnp.where(x >= 0, one, -one)


def _chip_block_bytes():
    """Per-chip (target block bytes, has_two_tensorcores)."""
    try:
        kind = jax.devices()[0].device_kind.lower()
    except Exception:  # pragma: no cover - defensive
        kind = ""
    if "v7" in kind:
        return 4 << 20, True     # 2 TCs; 64 MiB VMEM, 32 MiB default scoped
    if "v6" in kind:
        return 4 << 20, False    # 32 MiB default scoped VMEM
    if "v5" in kind:
        return 2 << 20, False    # v5e: 16 MiB default scoped VMEM
    return 2 << 20, False        # unknown chip: be conservative


def _sign_forward(x, donate: bool = False):
    """Elementwise sign(x) with (x >= 0) -> +1, else -1. Any shape/float dtype."""
    orig_shape = x.shape
    dtype = x.dtype
    itemsize = jnp.dtype(dtype).itemsize
    total = x.size

    one = jnp.ones((), dtype=dtype)
    x_flat = x.reshape(-1)

    main = (total // _LANES) * _LANES
    tail = total - main

    parts = []
    if main > 0:
        rows = main // _LANES
        x2d = (x_flat if tail == 0 else x_flat[:main]).reshape(rows, _LANES)

        # Sublane tile multiple for this dtype: f32 -> 8, bf16 -> 16, int8 -> 32.
        sub = max(8, 32 // itemsize)

        target_bytes, two_cores = _chip_block_bytes()
        # Block rows from a byte budget, rounded down to a sublane multiple.
        br = max(sub, (target_bytes // (_LANES * itemsize)) // sub * sub)
        # Never larger than the (sublane-rounded-up) row count.
        br = min(br, pl.cdiv(rows, sub) * sub)
        if two_cores:
            # Keep the grid >= ~4 steps so the parallel axis shards across
            # both TensorCores on v7x (no effect on tiny tensors).
            cap = max(sub, pl.cdiv(pl.cdiv(rows, 4), sub) * sub)
            br = min(br, cap)
        br = max(sub, (br // sub) * sub)

        grid = (pl.cdiv(rows, br),)

        call_kwargs = dict(
            out_shape=jax.ShapeDtypeStruct((rows, _LANES), dtype),
            grid=grid,
            in_specs=[pl.BlockSpec((br, _LANES), lambda i: (i, 0))],
            out_specs=pl.BlockSpec((br, _LANES), lambda i: (i, 0)),
            compiler_params=pltpu.CompilerParams(
                dimension_semantics=("parallel",),
            ),
            cost_estimate=pl.CostEstimate(
                flops=main,
                transcendentals=0,
                bytes_accessed=2 * main * itemsize,
            ),
        )
        if donate:
            # Output has identical shape/dtype; only useful if the caller
            # actually donates x (otherwise XLA inserts a copy).
            call_kwargs["input_output_aliases"] = {0: 0}

        out2d = pl.pallas_call(_sign_kernel, **call_kwargs)(x2d)
        parts.append(out2d.reshape(-1))

    if tail > 0:
        # <128-element tail: cheaper in the wrapper than padding the whole
        # tensor and paying an extra HBM round trip.
        parts.append(jnp.where(x_flat[main:] >= 0, one, -one))

    out_flat = parts[0] if len(parts) == 1 else jnp.concatenate(parts)
    return out_flat.reshape(orig_shape)


# --- training mode: same forward value, STE gradient (1 - tanh(x)^2) * g -----
@jax.custom_vjp
def _sign_ste_train(x):
    return _sign_forward(x)


def _sign_ste_train_fwd(x):
    return _sign_forward(x), x


def _sign_ste_train_bwd(x, g):
    # TODO(synk): this backward is plain jnp; a trivial elementwise Pallas
    # kernel could be used if it ever shows up on a profile.
    t = jnp.tanh(x)
    return ((1.0 - t * t).astype(g.dtype) * g,)


_sign_ste_train.defvjp(_sign_ste_train_fwd, _sign_ste_train_bwd)


def sign_ste(x, training: bool = False, donate: bool = False):
    """SignSTE forward. x: float array, any shape (NCHW expected).

    training=False: sign(x), gradient is whatever autodiff gives (zero).
    training=True : identical forward value, STE gradient (1 - tanh(x)^2)*g.
    """
    if training:
        return _sign_ste_train(x)
    return _sign_forward(x, donate=donate)


if __name__ == "__main__":
    key = jax.random.PRNGKey(0)
    # Small NCHW input consistent with the module's usage.
    x = jax.random.normal(key, (2, 4, 16, 16), dtype=jnp.float32)

    # Eval-mode forward (self.training == False).
    out_eval = jax.block_until_ready(sign_ste(x, training=False))
    # Training-mode forward (same forward value; STE only changes gradients).
    out_train = jax.block_until_ready(sign_ste(x, training=True))

    # Reference check in plain JAX.
    ref = jnp.where(x >= 0, 1.0, -1.0).astype(jnp.float32)
    assert out_eval.shape == x.shape and out_eval.dtype == x.dtype
    assert jnp.array_equal(out_eval, ref)
    assert jnp.array_equal(out_train, ref)

    # STE gradient check (training mode): d/dx sum(f(x)) == 1 - tanh(x)^2.
    g = jax.block_until_ready(jax.grad(lambda v: sign_ste(v, training=True).sum())(x))
    g_ref = 1.0 - jnp.tanh(x) ** 2
    assert jnp.allclose(g, g_ref, atol=1e-6, rtol=1e-6)

    # Non-128-divisible size exercises the prefix-kernel + jnp tail path.
    y = jax.random.normal(jax.random.PRNGKey(1), (3, 5, 7), dtype=jnp.float32)
    out_y = jax.block_until_ready(sign_ste(y))
    assert jnp.array_equal(out_y, jnp.where(y >= 0, 1.0, -1.0))

    print("KERNEL_OK")
</pallas_src>

<mosaic_0001>
module attributes {stable_mosaic.version = 11 : i64} {
  func.func @_sign_kernel(%arg0: i32, %arg1: memref<16x128xf32, #tpu.memory_space<vmem>>, %arg2: memref<16x128xf32, #tpu.memory_space<vmem>>) attributes {dimension_semantics = [#tpu.dimension_semantics<parallel>], iteration_bounds = array<i64: 1>, scalar_prefetch = 0 : i64, scratch_operands = 0 : i64, tpu.core_type = #tpu.core_type<tc>, window_params = [{transform_indices = @transform_0, window_bounds = array<i64: 16, 128>}, {transform_indices = @transform_1, window_bounds = array<i64: 16, 128>}]} {
    %c0 = arith.constant 0 : index
    %c0_0 = arith.constant 0 : index
    %0 = vector.load %arg1[%c0, %c0_0] : memref<16x128xf32, #tpu.memory_space<vmem>>, vector<16x128xf32>
    %cst = arith.constant 0.000000e+00 : f32
    %1 = vector.broadcast %cst : f32 to vector<16x128xf32>
    %2 = arith.cmpf oge, %0, %1 : vector<16x128xf32>
    %cst_1 = arith.constant 0.000000e+00 : f32
    %cst_2 = arith.constant 1.000000e+00 : f32
    %3 = arith.subf %cst_1, %cst_2 : f32
    %cst_3 = arith.constant 1.000000e+00 : f32
    %4 = vector.broadcast %cst_3 : f32 to vector<16x128xf32>
    %5 = vector.broadcast %3 : f32 to vector<16x128xf32>
    %6 = arith.select %2, %4, %5 : vector<16x128xi1>, vector<16x128xf32>
    %c0_4 = arith.constant 0 : index
    %c0_5 = arith.constant 0 : index
    %7 = vector.load %arg2[%c0_4, %c0_5] : memref<16x128xf32, #tpu.memory_space<vmem>>, vector<16x128xf32>
    tpu.vector_store %arg2[%c0_4, %c0_5], %6 {strides = array<i32>} : memref<16x128xf32, #tpu.memory_space<vmem>>, vector<16x128xf32>,
    return
  }
  func.func @transform_0(%arg0: i32) -> (i32, i32) {
    %c0_i32 = arith.constant 0 : i32
    %c0_i32_0 = arith.constant 0 : i32
    return %arg0, %c0_i32 : i32, i32
  }
  func.func @transform_1(%arg0: i32) -> (i32, i32) {
    %c0_i32 = arith.constant 0 : i32
    %c0_i32_0 = arith.constant 0 : i32
    return %arg0, %c0_i32 : i32, i32
  }
}

</mosaic_0001>

<llo_original>
// kernel: tpu_custom_call.1
$region0: #{tpu_custom_call.1}
  #allocation0 [shape = 'u32[]', space=smem, size = 0x4, offset = 0x4, fixed_abs, tag = 'smem constant byte address 0x4 - core index']
  #allocation1 [shape = 'u32[72,128]{1,0:T(1,128)}', space=vmem, size = 0x9000, scoped, tag = 'internal scratch']
  %s0 = inlined_call_operand.hbm [shape: f32[16,128], index: 0, kind: input, shape index: {}]
  %s1 = inlined_call_operand.hbm [shape: f32[16,128], index: 1, kind: output, shape index: {}]
  %s2 = sld [smem:[#allocation0]]
  $region18: #{tpu_custom_call.1} parent=0
    _
  %s4 = ssub.s32 1, %s2
  %s5 = scalar_select 0, %s4, %s2
  $region1: #{tpu_custom_call.1} parent=0
    #allocation2 [shape = 'u8[8192]{0}', space=vmem, size = 0x2000, scoped, tag = 'input window, operand 0, single buffered']
    #allocation3 [shape = 's32[1]{0}', space=sflag, size = 0x4, scoped, tag = 'scoped memory for tpu_custom_call.1']
    #allocation4 [shape = 's32[1]{0}', space=sflag, size = 0x4, scoped, tag = 'scoped memory for tpu_custom_call.1']
    #allocation5 [shape = 'u8[8192]{0}', space=vmem, size = 0x2000, scoped, tag = 'output window, operand 0, single buffered']
    %6 = vsyncpa [#allocation3], 0
    %7 = vsyncpa [#allocation4], 0
    // Predicated region
    $region2: #{tpu_custom_call.1} parent=1 // pred_check
      _
    $region3: #{tpu_custom_call.1} parent=1 // pred_check_branch
      %9 = sbr.rel (0) target = $region5
    $region4: #{tpu_custom_call.1} parent=1 // pred_region
      %11 = vsyncadd [#allocation3], 0
      %s12 = sshll.u32 %s0, 4
      %s13 = int_to_ptr.hbm [resolvable:$true] %s12
      %s14 = sshll.u32 [#allocation2], 4
      %s15 = int_to_ptr.vmem [resolvable:$true] %s14
      %20 = dma.hbm_to_vmem [thread:$0]  %s13, 256, %s15, [#allocation3], 128, 128, 8
    $region5: #{tpu_custom_call.1} parent=1 // pred_fallthru
      _
    // Predicated region
    $region6: #{tpu_custom_call.1} parent=1 // pred_check
      _
    $region7: #{tpu_custom_call.1} parent=1 // pred_check_branch
      %22 = sbr.rel (0) target = $region9
    $region8: #{tpu_custom_call.1} parent=1 // pred_region
      %24 = dma.done [#allocation3], 256
    $region9: #{tpu_custom_call.1} parent=1 // pred_fallthru
      _
    %v25 = vld [vmem:[#allocation2] sm:$0xff]
    %v26 = vld [vmem:[#allocation2 + $0x8] sm:$0xff]
    %vm27 = vcmp.ge.f32.partialorder %v25, 0.0
    %vm28 = vcmp.ge.f32.partialorder %v26, 0.0
    %v29 = vsel %vm27, 1.0, -1.0
    %v30 = vsel %vm28, 1.0, -1.0
    %31 = vst [vmem:[#allocation5] sm:$0xff] %v29
    %32 = vst [vmem:[#allocation5 + $0x8] sm:$0xff] %v30
    // Predicated region
    $region10: #{tpu_custom_call.1} parent=1 // pred_check
      _
    $region11: #{tpu_custom_call.1} parent=1 // pred_check_branch
      %34 = sbr.rel (0) target = $region13
    $region12: #{tpu_custom_call.1} parent=1 // pred_region
      %36 = vsyncadd [#allocation4], 0
      %s37 = sshll.u32 [#allocation5], 4
      %s38 = int_to_ptr.vmem [resolvable:$true] %s37
      %s39 = sshll.u32 %s1, 4
      %s40 = int_to_ptr.hbm [resolvable:$true] %s39
      %45 = dma.vmem_to_hbm [thread:$0]  %s38, 256, %s40, [#allocation4], 128, 128, 8
    $region13: #{tpu_custom_call.1} parent=1 // pred_fallthru
      _
    // Predicated region
    $region14: #{tpu_custom_call.1} parent=1 // pred_check
      _
    $region15: #{tpu_custom_call.1} parent=1 // pred_check_branch
      %47 = sbr.rel (0) target = $region17
    $region16: #{tpu_custom_call.1} parent=1 // pred_region
      %49 = dma.done [#allocation4], 256
    $region17: #{tpu_custom_call.1} parent=1 // pred_fallthru
      _
    %50 = vsyncpa [#allocation3], 1
    %51 = vsyncpa [#allocation4], 1

</llo_original>
